<compile_context>
chip_gen: v6e
topology: v6e:2x2x1
jax: 0.10.0
libtpu: 0.0.40
codegen_flags: <defaults>
</compile_context>

<pallas_src>
import math

import jax
import jax.numpy as jnp
from jax.experimental import pallas as pl
from jax.experimental.pallas import tpu as pltpu


def _round_up(v, m):
    return ((v + m - 1) // m) * m


def _largest_aligned_divisor(total, cap, unit):
    """Largest multiple of `unit` that divides `total` and is <= cap.

    `total` must itself be a multiple of `unit`."""
    q = total // unit
    best = 1
    m = 1
    while m * m <= q:
        if q % m == 0:
            for cand in (m, q // m):
                if cand * unit <= cap and cand > best:
                    best = cand
        m += 1
    return best * unit


def _vmem_limit_bytes():
    """Generation-aware scoped-VMEM budget.

    ~75% of physical VMEM, capped at 96 MiB: 96 MiB on 128 MiB parts (v5e/v6e),
    48 MiB on v7x's 64 MiB-per-TensorCore.  Falls back to a universally safe
    48 MiB if the hardware query is unavailable."""
    cap = None
    try:
        cap = getattr(pltpu.get_tpu_info(), "vmem_capacity_bytes", None)
    except Exception:
        cap = None
    if not cap:
        cap = 64 * 1024 * 1024
    return int(min(cap * 3 // 4, 96 * 1024 * 1024))


def _mlp_predict_kernel(x_ref, w1_ref, b1_ref, w2_ref, b2_ref, o_ref, acc_ref):
    """Fused flatten -> Linear -> ReLU -> Linear with a K-reduction grid axis.

    Grid: (M tiles [parallel], K tiles [arbitrary])
      x_ref  : (tm, tk)    input dtype (f32); cast to bf16 in-kernel
      w1_ref : (tk, H)     bf16  featurizer weight K-slab
      b1_ref : (1,  H)     f32   featurizer bias (folded into the acc init)
      w2_ref : (H, Cpad)   bf16  classifier weight (lane-padded, resident)
      b2_ref : (1, Cpad)   f32   classifier bias (lane-padded, resident)
      o_ref  : (tm, Cpad)  f32   logits tile (lane-dense store)
      acc_ref: (tm, H)     f32   VMEM accumulator for the featurizer GEMM
    """
    k = pl.program_id(1)

    # Fold b1 into the accumulator init (drops an (tm, H) f32 add from the epilogue).
    @pl.when(k == 0)
    def _():
        acc_ref[...] = jnp.broadcast_to(b1_ref[...], acc_ref.shape)

    # Featurizer partial GEMM: bf16 operands, f32 accumulation on the MXU.
    acc_ref[...] += jnp.dot(x_ref[...].astype(jnp.bfloat16), w1_ref[...],
                            preferred_element_type=jnp.float32)

    # Epilogue on the last K step: ReLU + classifier head + bias, dense store.
    @pl.when(k == pl.num_programs(1) - 1)
    def _():
        h = jnp.maximum(acc_ref[...], 0.0)
        logits = jnp.dot(h.astype(w2_ref.dtype), w2_ref[...],
                         preferred_element_type=jnp.float32) + b2_ref[...]
        o_ref[...] = logits.astype(o_ref.dtype)


class AlgorithmPallas:
    """ERM-style realization of DomainBed `Algorithm`:

        predict(x) = Linear(ReLU(Linear(flatten(x))))
        forward(x) = predict(x)

    Weight preparation (bf16 cast + padding) and tile selection happen once at
    construction; per-call work is just (optional) batch padding + the kernel.
    """

    def __init__(self, input_shape, num_classes, num_domains, hparams,
                 w1, b1, w2, b2, *, tm_max=256, tk_max=4096):
        self.input_shape = tuple(input_shape)
        self.num_classes = int(num_classes)
        self.num_domains = num_domains
        self.hparams = hparams

        d = math.prod(self.input_shape)                # static python int
        hidden = w1.shape[1]
        assert w1.shape[0] == d
        assert w2.shape == (hidden, self.num_classes)

        # ---- static tile selection (done once, not per forward call) ----
        self._tm_cap = max(8, (int(tm_max) // 8) * 8)        # sublane-aligned M cap
        tk_user = max(128, (int(tk_max) // 128) * 128)        # lane-aligned K cap
        c_pad = _round_up(self.num_classes, 128)              # lane-dense output width
        d_pad = _round_up(d, 128)

        vmem_limit = _vmem_limit_bytes()
        tile_budget = vmem_limit * 3 // 4                     # headroom for compiler scratch
        fixed = (self._tm_cap * hidden * 4                    # f32 accumulator
                 + 2 * hidden * c_pad * 2                     # resident w2 buffers (bf16)
                 + 2 * self._tm_cap * c_pad * 4               # output tiles (f32)
                 + 2 * hidden * 4 + 2 * c_pad * 4)            # biases
        per_tk = 2 * self._tm_cap * 4 + 2 * hidden * 2        # x(f32) + w1(bf16) double buffers
        tk_cap = max(128, ((tile_budget - fixed) // per_tk) // 128 * 128)
        tk_cap = min(tk_cap, tk_user, d_pad)

        # Prefer a K tile that divides round_up(D, 128) exactly, so x needs no K
        # padding copy; fall back to padding only for pathological divisor structure.
        tk = _largest_aligned_divisor(d_pad, tk_cap, 128)
        if tk < min(512, tk_cap):
            tk = tk_cap
            d_pad = _round_up(d, tk)

        self._d = d
        self._hidden = hidden
        self._d_pad = d_pad
        self._c_pad = c_pad
        self._tk = tk
        self._vmem_limit = vmem_limit

        # ---- one-time weight preparation (hoisted out of the forward path) ----
        w1_b = jnp.asarray(w1, jnp.bfloat16)
        if d_pad != d:
            w1_b = jnp.pad(w1_b, ((0, d_pad - d), (0, 0)))
        w2_b = jnp.asarray(w2, jnp.bfloat16)
        if c_pad != self.num_classes:
            w2_b = jnp.pad(w2_b, ((0, 0), (0, c_pad - self.num_classes)))
        b1_p = jnp.asarray(b1, jnp.float32).reshape(1, hidden)
        b2_p = jnp.asarray(b2, jnp.float32).reshape(1, self.num_classes)
        if c_pad != self.num_classes:
            b2_p = jnp.pad(b2_p, ((0, 0), (0, c_pad - self.num_classes)))

        self._w1 = w1_b
        self._w2 = w2_b
        self._b1 = b1_p
        self._b2 = b2_p

    # TODO(synk): update()/new_optimizer()/clone() are optimizer/training machinery
    #             with no forward compute; not translated.

    def predict(self, x):
        n = x.shape[0]
        d = math.prod(x.shape[1:])
        assert d == self._d, (d, self._d)

        # Per-call batch tiling: pad N only when needed (to a sublane multiple),
        # and keep the number of M tiles (== full w1 streams) minimal.
        n_pad = _round_up(n, 8)
        if n_pad <= self._tm_cap:
            tm = n_pad
        else:
            tm = self._tm_cap
            n_pad = _round_up(n, tm)

        x_flat = x.reshape(n, d)                # contiguous NCHW flatten: layout-only
        if (n_pad, self._d_pad) != (n, d):
            x_in = jnp.pad(x_flat, ((0, n_pad - n), (0, self._d_pad - d)))
        else:
            x_in = x_flat                       # no extra HBM pass over x

        hidden, c_pad, tk = self._hidden, self._c_pad, self._tk
        grid = (n_pad // tm, self._d_pad // tk)

        out = pl.pallas_call(
            _mlp_predict_kernel,
            out_shape=jax.ShapeDtypeStruct((n_pad, c_pad), jnp.float32),
            grid_spec=pltpu.PrefetchScalarGridSpec(
                num_scalar_prefetch=0,
                grid=grid,
                in_specs=[
                    pl.BlockSpec((tm, tk), lambda i, k: (i, k)),         # x tile
                    pl.BlockSpec((tk, hidden), lambda i, k: (k, 0)),     # w1 K-slab
                    pl.BlockSpec((1, hidden), lambda i, k: (0, 0)),      # b1 (resident)
                    pl.BlockSpec((hidden, c_pad), lambda i, k: (0, 0)),  # w2 (resident)
                    pl.BlockSpec((1, c_pad), lambda i, k: (0, 0)),       # b2 (resident)
                ],
                out_specs=pl.BlockSpec((tm, c_pad), lambda i, k: (i, 0)),
                scratch_shapes=[pltpu.VMEM((tm, hidden), jnp.float32)],
            ),
            compiler_params=pltpu.CompilerParams(
                # M axis independent, K axis carries the VMEM accumulator.
                dimension_semantics=("parallel", "arbitrary"),
                vmem_limit_bytes=self._vmem_limit,
            ),
        )(x_in, self._w1, self._b1, self._w2, self._b2)

        # Slice away batch / lane padding.
        return out[:n, :self.num_classes]

    def forward(self, x):
        return self.predict(x)

    __call__ = forward


def _reference_predict(x_nchw, w1, b1, w2, b2):
    """Pure-JAX reference mirroring the kernel's bf16-in / f32-accumulate dataflow."""
    n = x_nchw.shape[0]
    x_flat = x_nchw.reshape(n, -1)
    xb = x_flat.astype(jnp.bfloat16).astype(jnp.float32)
    w1b = w1.astype(jnp.bfloat16).astype(jnp.float32)
    w2b = w2.astype(jnp.bfloat16).astype(jnp.float32)
    h = jnp.maximum(
        jnp.dot(xb, w1b, precision=jax.lax.Precision.HIGHEST) + b1, 0.0)
    hb = h.astype(jnp.bfloat16).astype(jnp.float32)
    return jnp.dot(hb, w2b, precision=jax.lax.Precision.HIGHEST) + b2


if __name__ == "__main__":
    # DomainBed-style small config: input_shape=(4,16,16), num_classes=8, batch=2.
    key = jax.random.PRNGKey(0)
    k_x, k_w1, k_b1, k_w2, k_b2 = jax.random.split(key, 5)

    N, C, H, W = 2, 4, 16, 16
    D = C * H * W            # 1024 -> single K step at tk=1024, no K padding
    HID = 128
    NUM_CLASSES = 8

    x = jax.random.normal(k_x, (N, C, H, W), dtype=jnp.float32)
    w1 = jax.random.normal(k_w1, (D, HID), dtype=jnp.float32) * 0.02
    b1 = jax.random.normal(k_b1, (HID,), dtype=jnp.float32) * 0.02
    w2 = jax.random.normal(k_w2, (HID, NUM_CLASSES), dtype=jnp.float32) * 0.02
    b2 = jax.random.normal(k_b2, (NUM_CLASSES,), dtype=jnp.float32) * 0.02

    model = AlgorithmPallas((C, H, W), NUM_CLASSES, num_domains=3, hparams={},
                            w1=w1, b1=b1, w2=w2, b2=b2)

    out = model(x)                       # forward(x) -> predict(x)
    out = jax.block_until_ready(out)

    ref = _reference_predict(x, w1, b1, w2, b2)
    assert out.shape == (N, NUM_CLASSES)
    assert jnp.allclose(out, ref, atol=2e-3, rtol=2e-3), "mismatch vs reference"

    print("KERNEL_OK")
</pallas_src>

<mosaic_0001>
module attributes {stable_mosaic.version = 11 : i64} {
  func.func @_mlp_predict_kernel(%arg0: i32, %arg1: i32, %arg2: memref<8x1024xf32, #tpu.memory_space<vmem>>, %arg3: memref<1024x128xbf16, #tpu.memory_space<vmem>>, %arg4: memref<1x128xf32, #tpu.memory_space<vmem>>, %arg5: memref<128x128xbf16, #tpu.memory_space<vmem>>, %arg6: memref<1x128xf32, #tpu.memory_space<vmem>>, %arg7: memref<8x128xf32, #tpu.memory_space<vmem>>, %arg8: memref<8x128xf32, #tpu.memory_space<vmem>>) attributes {dimension_semantics = [#tpu.dimension_semantics<parallel>, #tpu.dimension_semantics<arbitrary>], iteration_bounds = array<i64: 1, 1>, scalar_prefetch = 0 : i64, scratch_operands = 1 : i64, tpu.core_type = #tpu.core_type<tc>, window_params = [{transform_indices = @transform_0, window_bounds = array<i64: 8, 1024>}, {transform_indices = @transform_1, window_bounds = array<i64: 1024, 128>}, {pipeline_mode = #tpu.pipeline_mode<synchronous>, transform_indices = @transform_2, window_bounds = array<i64: 1, 128>}, {pipeline_mode = #tpu.pipeline_mode<synchronous>, transform_indices = @transform_3, window_bounds = array<i64: 128, 128>}, {pipeline_mode = #tpu.pipeline_mode<synchronous>, transform_indices = @transform_4, window_bounds = array<i64: 1, 128>}, {transform_indices = @transform_5, window_bounds = array<i64: 8, 128>}]} {
    %c0_i32 = arith.constant 0 : i32
    %0 = arith.cmpi eq, %arg1, %c0_i32 : i32
    %1 = arith.extui %0 : i1 to i32
    %c0_i32_0 = arith.constant 0 : i32
    %2 = arith.cmpi ne, %1, %c0_i32_0 : i32
    scf.if %2 {
      %c0_10 = arith.constant 0 : index
      %c0_11 = arith.constant 0 : index
      %13 = vector.load %arg4[%c0_10, %c0_11] : memref<1x128xf32, #tpu.memory_space<vmem>>, vector<1x128xf32>
      %14 = vector.shape_cast %13 : vector<1x128xf32> to vector<1x128xf32>
      %15 = vector.broadcast %14 : vector<1x128xf32> to vector<8x128xf32>
      %c0_12 = arith.constant 0 : index
      %c0_13 = arith.constant 0 : index
      %16 = vector.load %arg8[%c0_12, %c0_13] : memref<8x128xf32, #tpu.memory_space<vmem>>, vector<8x128xf32>
      tpu.vector_store %arg8[%c0_12, %c0_13], %15 {strides = array<i32>} : memref<8x128xf32, #tpu.memory_space<vmem>>, vector<8x128xf32>,
    } else {
    }
    %c0 = arith.constant 0 : index
    %c0_1 = arith.constant 0 : index
    %3 = vector.load %arg8[%c0, %c0_1] : memref<8x128xf32, #tpu.memory_space<vmem>>, vector<8x128xf32>
    %c0_2 = arith.constant 0 : index
    %c0_3 = arith.constant 0 : index
    %4 = vector.load %arg2[%c0_2, %c0_3] : memref<8x1024xf32, #tpu.memory_space<vmem>>, vector<8x1024xf32>
    %5 = arith.truncf %4 : vector<8x1024xf32> to vector<8x1024xbf16>
    %c0_4 = arith.constant 0 : index
    %c0_5 = arith.constant 0 : index
    %6 = vector.load %arg3[%c0_4, %c0_5] : memref<1024x128xbf16, #tpu.memory_space<vmem>>, vector<1024x128xbf16>
    %cst = arith.constant dense<0.000000e+00> : vector<8x128xf32>
    %7 = tpu.matmul %5, %6, %cst {dimension_numbers = #tpu.dot_dimension_numbers<[1], [0], [0], [1], [0, 0, 1, 1], [], []>} : vector<8x1024xbf16>, vector<1024x128xbf16>, vector<8x128xf32> -> vector<8x128xf32>
    %8 = arith.addf %3, %7 : vector<8x128xf32>
    %c0_6 = arith.constant 0 : index
    %c0_7 = arith.constant 0 : index
    %9 = vector.load %arg8[%c0_6, %c0_7] : memref<8x128xf32, #tpu.memory_space<vmem>>, vector<8x128xf32>
    tpu.vector_store %arg8[%c0_6, %c0_7], %8 {strides = array<i32>} : memref<8x128xf32, #tpu.memory_space<vmem>>, vector<8x128xf32>,
    %c0_i32_8 = arith.constant 0 : i32
    %10 = arith.cmpi eq, %arg1, %c0_i32_8 : i32
    %11 = arith.extui %10 : i1 to i32
    %c0_i32_9 = arith.constant 0 : i32
    %12 = arith.cmpi ne, %11, %c0_i32_9 : i32
    scf.if %12 {
      %c0_10 = arith.constant 0 : index
      %c0_11 = arith.constant 0 : index
      %13 = vector.load %arg8[%c0_10, %c0_11] : memref<8x128xf32, #tpu.memory_space<vmem>>, vector<8x128xf32>
      %cst_12 = arith.constant 0.000000e+00 : f32
      %14 = vector.broadcast %cst_12 : f32 to vector<8x128xf32>
      %15 = arith.maximumf %13, %14 : vector<8x128xf32>
      %16 = arith.truncf %15 : vector<8x128xf32> to vector<8x128xbf16>
      %c0_13 = arith.constant 0 : index
      %c0_14 = arith.constant 0 : index
      %17 = vector.load %arg5[%c0_13, %c0_14] : memref<128x128xbf16, #tpu.memory_space<vmem>>, vector<128x128xbf16>
      %cst_15 = arith.constant dense<0.000000e+00> : vector<8x128xf32>
      %18 = tpu.matmul %16, %17, %cst_15 {dimension_numbers = #tpu.dot_dimension_numbers<[1], [0], [0], [1], [0, 0, 1, 1], [], []>} : vector<8x128xbf16>, vector<128x128xbf16>, vector<8x128xf32> -> vector<8x128xf32>
      %c0_16 = arith.constant 0 : index
      %c0_17 = arith.constant 0 : index
      %19 = vector.load %arg6[%c0_16, %c0_17] : memref<1x128xf32, #tpu.memory_space<vmem>>, vector<1x128xf32>
      %20 = vector.broadcast %19 : vector<1x128xf32> to vector<8x128xf32>
      %21 = arith.addf %18, %20 : vector<8x128xf32>
      %c0_18 = arith.constant 0 : index
      %c0_19 = arith.constant 0 : index
      %22 = vector.load %arg7[%c0_18, %c0_19] : memref<8x128xf32, #tpu.memory_space<vmem>>, vector<8x128xf32>
      tpu.vector_store %arg7[%c0_18, %c0_19], %21 {strides = array<i32>} : memref<8x128xf32, #tpu.memory_space<vmem>>, vector<8x128xf32>,
    } else {
    }
    return
  }
  func.func @transform_0(%arg0: i32, %arg1: i32) -> (i32, i32) {
    %c0_i32 = arith.constant 0 : i32
    return %arg0, %arg1 : i32, i32
  }
  func.func @transform_1(%arg0: i32, %arg1: i32) -> (i32, i32) {
    %c0_i32 = arith.constant 0 : i32
    %c0_i32_0 = arith.constant 0 : i32
    return %arg1, %c0_i32 : i32, i32
  }
  func.func @transform_2(%arg0: i32, %arg1: i32) -> (i32, i32) {
    %c0_i32 = arith.constant 0 : i32
    %c0_i32_0 = arith.constant 0 : i32
    %c0_i32_1 = arith.constant 0 : i32
    return %c0_i32, %c0_i32_0 : i32, i32
  }
  func.func @transform_3(%arg0: i32, %arg1: i32) -> (i32, i32) {
    %c0_i32 = arith.constant 0 : i32
    %c0_i32_0 = arith.constant 0 : i32
    %c0_i32_1 = arith.constant 0 : i32
    return %c0_i32, %c0_i32_0 : i32, i32
  }
  func.func @transform_4(%arg0: i32, %arg1: i32) -> (i32, i32) {
    %c0_i32 = arith.constant 0 : i32
    %c0_i32_0 = arith.constant 0 : i32
    %c0_i32_1 = arith.constant 0 : i32
    return %c0_i32, %c0_i32_0 : i32, i32
  }
  func.func @transform_5(%arg0: i32, %arg1: i32) -> (i32, i32) {
    %c0_i32 = arith.constant 0 : i32
    %c0_i32_0 = arith.constant 0 : i32
    return %arg0, %c0_i32 : i32, i32
  }
}

</mosaic_0001>

<llo_original>
// kernel: tpu_custom_call.1
$region0: #{tpu_custom_call.1}
  #allocation0 [shape = 'u32[]', space=smem, size = 0x4, offset = 0x4, fixed_abs, tag = 'smem constant byte address 0x4 - core index']
  #allocation1 [shape = 'u32[144,128]{1,0:T(1,128)}', space=vmem, size = 0x12000, scoped, tag = 'internal scratch']
  #allocation2 [shape = 'f32[8,128]{1,0:T(8,128)}', space=vmem, size = 0x1000, scoped, tag = 'scratch operand']
  %s0 = inlined_call_operand.hbm [shape: f32[8,1024], index: 0, kind: input, shape index: {}]
  %s1 = inlined_call_operand.hbm [shape: bf16[1024,128], index: 1, kind: input, shape index: {}]
  %s2 = inlined_call_operand.vmem [shape: f32[1,128], index: 2, kind: input, shape index: {}]
  %s3 = inlined_call_operand.hbm [shape: bf16[128,128], index: 3, kind: input, shape index: {}]
  %s4 = inlined_call_operand.vmem [shape: f32[1,128], index: 4, kind: input, shape index: {}]
  %s5 = inlined_call_operand.hbm [shape: f32[8,128], index: 5, kind: output, shape index: {}]
  %s6 = sld [smem:[#allocation0]]
  $region50: #{tpu_custom_call.1} parent=0
    _
  %s8 = ssub.s32 1, %s6
  %s9 = scalar_select 0, %s8, %s6
  $region1: #{tpu_custom_call.1} parent=0
    #allocation3 [shape = 'u8[32768]{0}', space=vmem, size = 0x8000, scoped, tag = 'input window, operand 0, single buffered']
    #allocation4 [shape = 's32[1]{0}', space=sflag, size = 0x4, scoped, tag = 'scoped memory for tpu_custom_call.1']
    #allocation5 [shape = 's32[1]{0}', space=sflag, size = 0x4, scoped, tag = 'scoped memory for tpu_custom_call.1']
    #allocation6 [shape = 'u8[262144]{0}', space=vmem, size = 0x40000, scoped, tag = 'input window, operand 1, single buffered']
    #allocation7 [shape = 's32[1]{0}', space=sflag, size = 0x4, scoped, tag = 'scoped memory for tpu_custom_call.1']
    #allocation8 [shape = 'u8[32768]{0}', space=vmem, size = 0x8000, scoped, tag = 'input window, operand 3, single buffered']
    #allocation9 [shape = 'u8[4096]{0}', space=vmem, size = 0x1000, scoped, tag = 'output window, operand 0, single buffered']
    %10 = vsyncpa [#allocation4], 0
    %11 = vsyncpa [#allocation7], 0
    %12 = vsyncpa [#allocation5], 0
    // Predicated region
    $region2: #{tpu_custom_call.1} parent=1 // pred_check
      _
    $region3: #{tpu_custom_call.1} parent=1 // pred_check_branch
      %14 = sbr.rel (0) target = $region5
    $region4: #{tpu_custom_call.1} parent=1 // pred_region
      %s16 = ssub.s32 1024, 1024
      %17 = vsyncadd [#allocation4], %s16
      %s19 = sshll.u32 [#allocation3], 4
      %s20 = int_to_ptr.vmem [resolvable:$true] %s19
      %22 = dma.hbm_to_vmem [thread:$0]  %s0, 1024, %s20, [#allocation4]
    $region5: #{tpu_custom_call.1} parent=1 // pred_fallthru
      _
    // Predicated region
    $region6: #{tpu_custom_call.1} parent=1 // pred_check
      _
    $region7: #{tpu_custom_call.1} parent=1 // pred_check_branch
      %24 = sbr.rel (0) target = $region9
    $region8: #{tpu_custom_call.1} parent=1 // pred_region
      %s26 = ssub.s32 8192, 8192
      %27 = vsyncadd [#allocation7], %s26
      %s28 = sshll.u32 [#allocation6], 4
      %s29 = int_to_ptr.vmem [resolvable:$true] %s28
      %34 = dma.hbm_to_vmem [thread:$0]  %s1, 8192, %s29, [#allocation7], 64, 64, 4
    $region9: #{tpu_custom_call.1} parent=1 // pred_fallthru
      _
    // Predicated region
    $region10: #{tpu_custom_call.1} parent=1 // pred_check
      _
    $region11: #{tpu_custom_call.1} parent=1 // pred_check_branch
      %36 = sbr.rel (0) target = $region13
    $region12: #{tpu_custom_call.1} parent=1 // pred_region
      _
    $region13: #{tpu_custom_call.1} parent=1 // pred_fallthru
      _
    // Predicated region
    $region14: #{tpu_custom_call.1} parent=1 // pred_check
      _
    $region15: #{tpu_custom_call.1} parent=1 // pred_check_branch
      %38 = sbr.rel (0) target = $region17
    $region16: #{tpu_custom_call.1} parent=1 // pred_region
      %s40 = ssub.s32 1024, 1024
      %41 = vsyncadd [#allocation7], %s40
      %s42 = sshll.u32 [#allocation8], 4
      %s43 = int_to_ptr.vmem [resolvable:$true] %s42
      %48 = dma.hbm_to_vmem [thread:$0]  %s3, 1024, %s43, [#allocation7], 64, 64, 4
    $region17: #{tpu_custom_call.1} parent=1 // pred_fallthru
      _
    // Predicated region
    $region18: #{tpu_custom_call.1} parent=1 // pred_check
      _
    $region19: #{tpu_custom_call.1} parent=1 // pred_check_branch
      %50 = sbr.rel (0) target = $region21
    $region20: #{tpu_custom_call.1} parent=1 // pred_region
      _
    $region21: #{tpu_custom_call.1} parent=1 // pred_fallthru
      _
    // Predicated region
    $region22: #{tpu_custom_call.1} parent=1 // pred_check
      _
    $region23: #{tpu_custom_call.1} parent=1 // pred_check_branch
      %52 = sbr.rel (0) target = $region25
    $region24: #{tpu_custom_call.1} parent=1 // pred_region
      %53 = dma.done [#allocation4], 1024
    $region25: #{tpu_custom_call.1} parent=1 // pred_fallthru
      _
    // Predicated region
    $region26: #{tpu_custom_call.1} parent=1 // pred_check
      _
    $region27: #{tpu_custom_call.1} parent=1 // pred_check_branch
      %55 = sbr.rel (0) target = $region29
    $region28: #{tpu_custom_call.1} parent=1 // pred_region
      %56 = dma.done [#allocation7], 8192
    $region29: #{tpu_custom_call.1} parent=1 // pred_fallthru
      _
    // Predicated region
    $region30: #{tpu_custom_call.1} parent=1 // pred_check
      _
    $region31: #{tpu_custom_call.1} parent=1 // pred_check_branch
      %58 = sbr.rel (0) target = $region33
    $region32: #{tpu_custom_call.1} parent=1 // pred_region
      %59 = dma.done [#allocation7], 1024
    $region33: #{tpu_custom_call.1} parent=1 // pred_fallthru
      _
    %p61 = scmp.eq.s32.totalorder 0, 0
    // Predicated region
    $region34: #{tpu_custom_call.1} parent=1 // pred_check
      %p62 = pneg %p61
    $region35: #{tpu_custom_call.1} parent=1 // pred_check_branch
      %64 = sbr.rel (%p62) target = $region37
    $region36: #{tpu_custom_call.1} parent=1 // pred_region
      %v65 = vld [vmem:[%s2] sm:$0x1]
      %v67 = vlaneseq
      %v68 = vshrl.u32 %v67, 7
      %v69 = vsub.s32 0, %v68
      %v70 = vrot.slane %v65, %v69
      %72 = vst [vmem:[#allocation2] sm:$0xff] %v70
    $region37: #{tpu_custom_call.1} parent=1 // pred_fallthru
      _
    %v73 = vld [vmem:[#allocation2] sm:$0xff]
    %v74 = vld [vmem:[#allocation3] sm:$0xff]
    %v75 = vld [vmem:[#allocation3 + $0x8] sm:$0xff]
    %v76 = vld [vmem:[#allocation3 + $0x10] sm:$0xff]
    %v77 = vld [vmem:[#allocation3 + $0x18] sm:$0xff]
    %v78 = vld [vmem:[#allocation3 + $0x20] sm:$0xff]
    %v79 = vld [vmem:[#allocation3 + $0x28] sm:$0xff]
    %v80 = vld [vmem:[#allocation3 + $0x30] sm:$0xff]
    %v81 = vld [vmem:[#allocation3 + $0x38] sm:$0xff]
    %v82 = vpack.c.bf16 %v74, %v74
    %v83 = vpack.c.bf16 %v75, %v75
    %v84 = vpack.c.bf16 %v76, %v76
    %v85 = vpack.c.bf16 %v77, %v77
    %v86 = vpack.c.bf16 %v78, %v78
    %v87 = vpack.c.bf16 %v79, %v79
    %v88 = vpack.c.bf16 %v80, %v80
    %v89 = vpack.c.bf16 %v81, %v81
    %v90 = vld [vmem:[#allocation6] sm:$0xf]
    %v91 = vld [vmem:[#allocation6 + $0x4] sm:$0xf]
    %v92 = vld [vmem:[#allocation6 + $0x8] sm:$0xf]
    %v93 = vld [vmem:[#allocation6 + $0xc] sm:$0xf]
    %v94 = vld [vmem:[#allocation6 + $0x10] sm:$0xf]
    %v95 = vld [vmem:[#allocation6 + $0x14] sm:$0xf]
    %v96 = vld [vmem:[#allocation6 + $0x18] sm:$0xf]
    %v97 = vld [vmem:[#allocation6 + $0x1c] sm:$0xf]
    %v98 = vld [vmem:[#allocation6 + $0x20] sm:$0xf]
    %v99 = vld [vmem:[#allocation6 + $0x24] sm:$0xf]
    %v100 = vld [vmem:[#allocation6 + $0x28] sm:$0xf]
    %v101 = vld [vmem:[#allocation6 + $0x2c] sm:$0xf]
    %v102 = vld [vmem:[#allocation6 + $0x30] sm:$0xf]
    %v103 = vld [vmem:[#allocation6 + $0x34] sm:$0xf]
    %v104 = vld [vmem:[#allocation6 + $0x38] sm:$0xf]
    %v105 = vld [vmem:[#allocation6 + $0x3c] sm:$0xf]
    %v106 = vld [vmem:[#allocation6 + $0x40] sm:$0xf]
    %v107 = vld [vmem:[#allocation6 + $0x44] sm:$0xf]
    %v108 = vld [vmem:[#allocation6 + $0x48] sm:$0xf]
    %v109 = vld [vmem:[#allocation6 + $0x4c] sm:$0xf]
    %v110 = vld [vmem:[#allocation6 + $0x50] sm:$0xf]
    %v111 = vld [vmem:[#allocation6 + $0x54] sm:$0xf]
    %v112 = vld [vmem:[#allocation6 + $0x58] sm:$0xf]
    %v113 = vld [vmem:[#allocation6 + $0x5c] sm:$0xf]
    %v114 = vld [vmem:[#allocation6 + $0x60] sm:$0xf]
    %v115 = vld [vmem:[#allocation6 + $0x64] sm:$0xf]
    %v116 = vld [vmem:[#allocation6 + $0x68] sm:$0xf]
    %v117 = vld [vmem:[#allocation6 + $0x6c] sm:$0xf]
    %v118 = vld [vmem:[#allocation6 + $0x70] sm:$0xf]
    %v119 = vld [vmem:[#allocation6 + $0x74] sm:$0xf]
    %v120 = vld [vmem:[#allocation6 + $0x78] sm:$0xf]
    %v121 = vld [vmem:[#allocation6 + $0x7c] sm:$0xf]
    %v122 = vld [vmem:[#allocation6 + $0x80] sm:$0xf]
    %v123 = vld [vmem:[#allocation6 + $0x84] sm:$0xf]
    %v124 = vld [vmem:[#allocation6 + $0x88] sm:$0xf]
    %v125 = vld [vmem:[#allocation6 + $0x8c] sm:$0xf]
    %v126 = vld [vmem:[#allocation6 + $0x90] sm:$0xf]
    %v127 = vld [vmem:[#allocation6 + $0x94] sm:$0xf]
    %v128 = vld [vmem:[#allocation6 + $0x98] sm:$0xf]
    %v129 = vld [vmem:[#allocation6 + $0x9c] sm:$0xf]
    %v130 = vld [vmem:[#allocation6 + $0xa0] sm:$0xf]
    %v131 = vld [vmem:[#allocation6 + $0xa4] sm:$0xf]
    %v132 = vld [vmem:[#allocation6 + $0xa8] sm:$0xf]
    %v133 = vld [vmem:[#allocation6 + $0xac] sm:$0xf]
    %v134 = vld [vmem:[#allocation6 + $0xb0] sm:$0xf]
    %v135 = vld [vmem:[#allocation6 + $0xb4] sm:$0xf]
    %v136 = vld [vmem:[#allocation6 + $0xb8] sm:$0xf]
    %v137 = vld [vmem:[#allocation6 + $0xbc] sm:$0xf]
    %v138 = vld [vmem:[#allocation6 + $0xc0] sm:$0xf]
    %v139 = vld [vmem:[#allocation6 + $0xc4] sm:$0xf]
    %v140 = vld [vmem:[#allocation6 + $0xc8] sm:$0xf]
    %v141 = vld [vmem:[#allocation6 + $0xcc] sm:$0xf]
    %v142 = vld [vmem:[#allocation6 + $0xd0] sm:$0xf]
    %v143 = vld [vmem:[#allocation6 + $0xd4] sm:$0xf]
    %v144 = vld [vmem:[#allocation6 + $0xd8] sm:$0xf]
    %v145 = vld [vmem:[#allocation6 + $0xdc] sm:$0xf]
    %v146 = vld [vmem:[#allocation6 + $0xe0] sm:$0xf]
    %v147 = vld [vmem:[#allocation6 + $0xe4] sm:$0xf]
    %v148 = vld [vmem:[#allocation6 + $0xe8] sm:$0xf]
    %v149 = vld [vmem:[#allocation6 + $0xec] sm:$0xf]
    %v150 = vld [vmem:[#allocation6 + $0xf0] sm:$0xf]
    %v151 = vld [vmem:[#allocation6 + $0xf4] sm:$0xf]
    %v152 = vld [vmem:[#allocation6 + $0xf8] sm:$0xf]
    %v153 = vld [vmem:[#allocation6 + $0xfc] sm:$0xf]
    %v154 = vld [vmem:[#allocation6 + $0x100] sm:$0xf]
    %v155 = vld [vmem:[#allocation6 + $0x104] sm:$0xf]
    %v156 = vld [vmem:[#allocation6 + $0x108] sm:$0xf]
    %v157 = vld [vmem:[#allocation6 + $0x10c] sm:$0xf]
    %v158 = vld [vmem:[#allocation6 + $0x110] sm:$0xf]
    %v159 = vld [vmem:[#allocation6 + $0x114] sm:$0xf]
    %v160 = vld [vmem:[#allocation6 + $0x118] sm:$0xf]
    %v161 = vld [vmem:[#allocation6 + $0x11c] sm:$0xf]
    %v162 = vld [vmem:[#allocation6 + $0x120] sm:$0xf]
    %v163 = vld [vmem:[#allocation6 + $0x124] sm:$0xf]
    %v164 = vld [vmem:[#allocation6 + $0x128] sm:$0xf]
    %v165 = vld [vmem:[#allocation6 + $0x12c] sm:$0xf]
    %v166 = vld [vmem:[#allocation6 + $0x130] sm:$0xf]
    %v167 = vld [vmem:[#allocation6 + $0x134] sm:$0xf]
    %v168 = vld [vmem:[#allocation6 + $0x138] sm:$0xf]
    %v169 = vld [vmem:[#allocation6 + $0x13c] sm:$0xf]
    %v170 = vld [vmem:[#allocation6 + $0x140] sm:$0xf]
    %v171 = vld [vmem:[#allocation6 + $0x144] sm:$0xf]
    %v172 = vld [vmem:[#allocation6 + $0x148] sm:$0xf]
    %v173 = vld [vmem:[#allocation6 + $0x14c] sm:$0xf]
    %v174 = vld [vmem:[#allocation6 + $0x150] sm:$0xf]
    %v175 = vld [vmem:[#allocation6 + $0x154] sm:$0xf]
    %v176 = vld [vmem:[#allocation6 + $0x158] sm:$0xf]
    %v177 = vld [vmem:[#allocation6 + $0x15c] sm:$0xf]
    %v178 = vld [vmem:[#allocation6 + $0x160] sm:$0xf]
    %v179 = vld [vmem:[#allocation6 + $0x164] sm:$0xf]
    %v180 = vld [vmem:[#allocation6 + $0x168] sm:$0xf]
    %v181 = vld [vmem:[#allocation6 + $0x16c] sm:$0xf]
    %v182 = vld [vmem:[#allocation6 + $0x170] sm:$0xf]
    %v183 = vld [vmem:[#allocation6 + $0x174] sm:$0xf]
    %v184 = vld [vmem:[#allocation6 + $0x178] sm:$0xf]
    %v185 = vld [vmem:[#allocation6 + $0x17c] sm:$0xf]
    %v186 = vld [vmem:[#allocation6 + $0x180] sm:$0xf]
    %v187 = vld [vmem:[#allocation6 + $0x184] sm:$0xf]
    %v188 = vld [vmem:[#allocation6 + $0x188] sm:$0xf]
    %v189 = vld [vmem:[#allocation6 + $0x18c] sm:$0xf]
    %v190 = vld [vmem:[#allocation6 + $0x190] sm:$0xf]
    %v191 = vld [vmem:[#allocation6 + $0x194] sm:$0xf]
    %v192 = vld [vmem:[#allocation6 + $0x198] sm:$0xf]
    %v193 = vld [vmem:[#allocation6 + $0x19c] sm:$0xf]
    %v194 = vld [vmem:[#allocation6 + $0x1a0] sm:$0xf]
    %v195 = vld [vmem:[#allocation6 + $0x1a4] sm:$0xf]
    %v196 = vld [vmem:[#allocation6 + $0x1a8] sm:$0xf]
    %v197 = vld [vmem:[#allocation6 + $0x1ac] sm:$0xf]
    %v198 = vld [vmem:[#allocation6 + $0x1b0] sm:$0xf]
    %v199 = vld [vmem:[#allocation6 + $0x1b4] sm:$0xf]
    %v200 = vld [vmem:[#allocation6 + $0x1b8] sm:$0xf]
    %v201 = vld [vmem:[#allocation6 + $0x1bc] sm:$0xf]
    %v202 = vld [vmem:[#allocation6 + $0x1c0] sm:$0xf]
    %v203 = vld [vmem:[#allocation6 + $0x1c4] sm:$0xf]
    %v204 = vld [vmem:[#allocation6 + $0x1c8] sm:$0xf]
    %v205 = vld [vmem:[#allocation6 + $0x1cc] sm:$0xf]
    %v206 = vld [vmem:[#allocation6 + $0x1d0] sm:$0xf]
    %v207 = vld [vmem:[#allocation6 + $0x1d4] sm:$0xf]
    %v208 = vld [vmem:[#allocation6 + $0x1d8] sm:$0xf]
    %v209 = vld [vmem:[#allocation6 + $0x1dc] sm:$0xf]
    %v210 = vld [vmem:[#allocation6 + $0x1e0] sm:$0xf]
    %v211 = vld [vmem:[#allocation6 + $0x1e4] sm:$0xf]
    %v212 = vld [vmem:[#allocation6 + $0x1e8] sm:$0xf]
    %v213 = vld [vmem:[#allocation6 + $0x1ec] sm:$0xf]
    %v214 = vld [vmem:[#allocation6 + $0x1f0] sm:$0xf]
    %v215 = vld [vmem:[#allocation6 + $0x1f4] sm:$0xf]
    %v216 = vld [vmem:[#allocation6 + $0x1f8] sm:$0xf]
    %v217 = vld [vmem:[#allocation6 + $0x1fc] sm:$0xf]
    %v346 = vunpack.c.l.b16 %v90
    %v347 = vunpack.c.l.b16 %v91
    %v348 = vunpack.c.l.b16 %v92
    %v349 = vunpack.c.l.b16 %v93
    %v350 = vunpack.c.l.b16 %v94
    %v351 = vunpack.c.l.b16 %v95
    %v352 = vunpack.c.l.b16 %v96
    %v353 = vunpack.c.l.b16 %v97
    %v354 = vunpack.c.l.b16 %v98
    %v355 = vunpack.c.l.b16 %v99
    %v356 = vunpack.c.l.b16 %v100
    %v357 = vunpack.c.l.b16 %v101
    %v358 = vunpack.c.l.b16 %v102
    %v359 = vunpack.c.l.b16 %v103
    %v360 = vunpack.c.l.b16 %v104
    %v361 = vunpack.c.l.b16 %v105
    %v362 = vunpack.c.l.b16 %v106
    %v363 = vunpack.c.l.b16 %v107
    %v364 = vunpack.c.l.b16 %v108
    %v365 = vunpack.c.l.b16 %v109
    %v366 = vunpack.c.l.b16 %v110
    %v367 = vunpack.c.l.b16 %v111
    %v368 = vunpack.c.l.b16 %v112
    %v369 = vunpack.c.l.b16 %v113
    %v370 = vunpack.c.l.b16 %v114
    %v371 = vunpack.c.l.b16 %v115
    %v372 = vunpack.c.l.b16 %v116
    %v373 = vunpack.c.l.b16 %v117
    %v374 = vunpack.c.l.b16 %v118
    %v375 = vunpack.c.l.b16 %v119
    %v376 = vunpack.c.l.b16 %v120
    %v377 = vunpack.c.l.b16 %v121
    %v378 = vunpack.c.l.b16 %v122
    %v379 = vunpack.c.l.b16 %v123
    %v380 = vunpack.c.l.b16 %v124
    %v381 = vunpack.c.l.b16 %v125
    %v382 = vunpack.c.l.b16 %v126
    %v383 = vunpack.c.l.b16 %v127
    %v384 = vunpack.c.l.b16 %v128
    %v385 = vunpack.c.l.b16 %v129
    %v386 = vunpack.c.l.b16 %v130
    %v387 = vunpack.c.l.b16 %v131
    %v388 = vunpack.c.l.b16 %v132
    %v389 = vunpack.c.l.b16 %v133
    %v390 = vunpack.c.l.b16 %v134
    %v391 = vunpack.c.l.b16 %v135
    %v392 = vunpack.c.l.b16 %v136
    %v393 = vunpack.c.l.b16 %v137
    %v394 = vunpack.c.l.b16 %v138
    %v395 = vunpack.c.l.b16 %v139
    %v396 = vunpack.c.l.b16 %v140
    %v397 = vunpack.c.l.b16 %v141
    %v398 = vunpack.c.l.b16 %v142
    %v399 = vunpack.c.l.b16 %v143
    %v400 = vunpack.c.l.b16 %v144
    %v401 = vunpack.c.l.b16 %v145
    %v402 = vunpack.c.l.b16 %v146
    %v403 = vunpack.c.l.b16 %v147
    %v404 = vunpack.c.l.b16 %v148
    %v405 = vunpack.c.l.b16 %v149
    %v406 = vunpack.c.l.b16 %v150
    %v407 = vunpack.c.l.b16 %v151
    %v408 = vunpack.c.l.b16 %v152
    %v409 = vunpack.c.l.b16 %v153
    %v410 = vunpack.c.l.b16 %v154
    %v411 = vunpack.c.l.b16 %v155
    %v412 = vunpack.c.l.b16 %v156
    %v413 = vunpack.c.l.b16 %v157
    %v414 = vunpack.c.l.b16 %v158
    %v415 = vunpack.c.l.b16 %v159
    %v416 = vunpack.c.l.b16 %v160
    %v417 = vunpack.c.l.b16 %v161
    %v418 = vunpack.c.l.b16 %v162
    %v419 = vunpack.c.l.b16 %v163
    %v420 = vunpack.c.l.b16 %v164
    %v421 = vunpack.c.l.b16 %v165
    %v422 = vunpack.c.l.b16 %v166
    %v423 = vunpack.c.l.b16 %v167
    %v424 = vunpack.c.l.b16 %v168
    %v425 = vunpack.c.l.b16 %v169
    %v426 = vunpack.c.l.b16 %v170
    %v427 = vunpack.c.l.b16 %v171
    %v428 = vunpack.c.l.b16 %v172
    %v429 = vunpack.c.l.b16 %v173
    %v430 = vunpack.c.l.b16 %v174
    %v431 = vunpack.c.l.b16 %v175
    %v432 = vunpack.c.l.b16 %v176
    %v433 = vunpack.c.l.b16 %v177
    %v434 = vunpack.c.l.b16 %v178
    %v435 = vunpack.c.l.b16 %v179
    %v436 = vunpack.c.l.b16 %v180
    %v437 = vunpack.c.l.b16 %v181
    %v438 = vunpack.c.l.b16 %v182
    %v439 = vunpack.c.l.b16 %v183
    %v440 = vunpack.c.l.b16 %v184
    %v441 = vunpack.c.l.b16 %v185
    %v442 = vunpack.c.l.b16 %v186
    %v443 = vunpack.c.l.b16 %v187
    %v444 = vunpack.c.l.b16 %v188
    %v445 = vunpack.c.l.b16 %v189
    %v446 = vunpack.c.l.b16 %v190
    %v447 = vunpack.c.l.b16 %v191
    %v448 = vunpack.c.l.b16 %v192
    %v449 = vunpack.c.l.b16 %v193
    %v450 = vunpack.c.l.b16 %v194
    %v451 = vunpack.c.l.b16 %v195
    %v452 = vunpack.c.l.b16 %v196
    %v453 = vunpack.c.l.b16 %v197
    %v454 = vunpack.c.l.b16 %v198
    %v455 = vunpack.c.l.b16 %v199
    %v456 = vunpack.c.l.b16 %v200
    %v457 = vunpack.c.l.b16 %v201
    %v458 = vunpack.c.l.b16 %v202
    %v459 = vunpack.c.l.b16 %v203
    %v460 = vunpack.c.l.b16 %v204
    %v461 = vunpack.c.l.b16 %v205
    %v462 = vunpack.c.l.b16 %v206
    %v463 = vunpack.c.l.b16 %v207
    %v464 = vunpack.c.l.b16 %v208
    %v465 = vunpack.c.l.b16 %v209
    %v466 = vunpack.c.l.b16 %v210
    %v467 = vunpack.c.l.b16 %v211
    %v468 = vunpack.c.l.b16 %v212
    %v469 = vunpack.c.l.b16 %v213
    %v470 = vunpack.c.l.b16 %v214
    %v471 = vunpack.c.l.b16 %v215
    %v472 = vunpack.c.l.b16 %v216
    %v473 = vunpack.c.l.b16 %v217
    %v474 = vpack.c.b16 %v347, %v346
    %v475 = vpack.c.b16 %v349, %v348
    %v476 = vpack.c.b16 %v351, %v350
    %v477 = vpack.c.b16 %v353, %v352
    %v478 = vpack.c.b16 %v355, %v354
    %v479 = vpack.c.b16 %v357, %v356
    %v480 = vpack.c.b16 %v359, %v358
    %v481 = vpack.c.b16 %v361, %v360
    %v482 = vpack.c.b16 %v363, %v362
    %v483 = vpack.c.b16 %v365, %v364
    %v484 = vpack.c.b16 %v367, %v366
    %v485 = vpack.c.b16 %v369, %v368
    %v486 = vpack.c.b16 %v371, %v370
    %v487 = vpack.c.b16 %v373, %v372
    %v488 = vpack.c.b16 %v375, %v374
    %v489 = vpack.c.b16 %v377, %v376
    %v490 = vpack.c.b16 %v379, %v378
    %v491 = vpack.c.b16 %v381, %v380
    %v492 = vpack.c.b16 %v383, %v382
    %v493 = vpack.c.b16 %v385, %v384
    %v494 = vpack.c.b16 %v387, %v386
    %v495 = vpack.c.b16 %v389, %v388
    %v496 = vpack.c.b16 %v391, %v390
    %v497 = vpack.c.b16 %v393, %v392
    %v498 = vpack.c.b16 %v395, %v394
    %v499 = vpack.c.b16 %v397, %v396
    %v500 = vpack.c.b16 %v399, %v398
    %v501 = vpack.c.b16 %v401, %v400
    %v502 = vpack.c.b16 %v403, %v402
    %v503 = vpack.c.b16 %v405, %v404
    %v504 = vpack.c.b16 %v407, %v406
    %v505 = vpack.c.b16 %v409, %v408
    %v506 = vpack.c.b16 %v411, %v410
    %v507 = vpack.c.b16 %v413, %v412
    %v508 = vpack.c.b16 %v415, %v414
    %v509 = vpack.c.b16 %v417, %v416
    %v510 = vpack.c.b16 %v419, %v418
    %v511 = vpack.c.b16 %v421, %v420
    %v512 = vpack.c.b16 %v423, %v422
    %v513 = vpack.c.b16 %v425, %v424
    %v514 = vpack.c.b16 %v427, %v426
    %v515 = vpack.c.b16 %v429, %v428
    %v516 = vpack.c.b16 %v431, %v430
    %v517 = vpack.c.b16 %v433, %v432
    %v518 = vpack.c.b16 %v435, %v434
    %v519 = vpack.c.b16 %v437, %v436
    %v520 = vpack.c.b16 %v439, %v438
    %v521 = vpack.c.b16 %v441, %v440
    %v522 = vpack.c.b16 %v443, %v442
    %v523 = vpack.c.b16 %v445, %v444
    %v524 = vpack.c.b16 %v447, %v446
    %v525 = vpack.c.b16 %v449, %v448
    %v526 = vpack.c.b16 %v451, %v450
    %v527 = vpack.c.b16 %v453, %v452
    %v528 = vpack.c.b16 %v455, %v454
    %v529 = vpack.c.b16 %v457, %v456
    %v530 = vpack.c.b16 %v459, %v458
    %v531 = vpack.c.b16 %v461, %v460
    %v532 = vpack.c.b16 %v463, %v462
    %v533 = vpack.c.b16 %v465, %v464
    %v534 = vpack.c.b16 %v467, %v466
    %v535 = vpack.c.b16 %v469, %v468
    %v536 = vpack.c.b16 %v471, %v470
    %v537 = vpack.c.b16 %v473, %v472
    %602 = vmatprep.subr.bf16.mxu0 0
    %603 = vmatpush1.bf16.msra.mxu0 %v481
    %604 = vmatprep.subr.bf16.mxu0 0
    %605 = vmatpush1.bf16.msra.mxu0 %v480
    %606 = vmatprep.subr.bf16.mxu0 0
    %607 = vmatpush1.bf16.msra.mxu0 %v479
    %608 = vmatprep.subr.bf16.mxu0 0
    %609 = vmatpush1.bf16.msra.mxu0 %v478
    %610 = vmatprep.subr.bf16.mxu0 0
    %611 = vmatpush1.bf16.msra.mxu0 %v477
    %612 = vmatprep.subr.bf16.mxu0 0
    %613 = vmatpush1.bf16.msra.mxu0 %v476
    %614 = vmatprep.subr.bf16.mxu0 0
    %615 = vmatpush1.bf16.msra.mxu0 %v475
    %616 = vmatprep.subr.bf16.mxu0 0
    %617 = vmatpush1.bf16.msra.mxu0 %v474
    %618 = vmatprep.subr.bf16.mxu0 0
    %619 = vmatpush2.bf16.msra.mxu0 %v489
    %620 = vmatprep.subr.bf16.mxu0 0
    %621 = vmatpush2.bf16.msra.mxu0 %v488
    %622 = vmatprep.subr.bf16.mxu0 0
    %623 = vmatpush2.bf16.msra.mxu0 %v487
    %624 = vmatprep.subr.bf16.mxu0 0
    %625 = vmatpush2.bf16.msra.mxu0 %v486
    %626 = vmatprep.subr.bf16.mxu0 0
    %627 = vmatpush2.bf16.msra.mxu0 %v485
    %628 = vmatprep.subr.bf16.mxu0 0
    %629 = vmatpush2.bf16.msra.mxu0 %v484
    %630 = vmatprep.subr.bf16.mxu0 0
    %631 = vmatpush2.bf16.msra.mxu0 %v483
    %632 = vmatprep.subr.bf16.mxu0 0
    %633 = vmatpush2.bf16.msra.mxu0 %v482
    %634 = vmatprep.mubr.bf16.mxu0 %v83
    %635 = vmatmul.mubr.bf16.gmra.mxu0 %v82
    %v636 = vpop.f32.mrf.mxu0
    %v637 = vadd.f32 0.0, %v636
    %v638 = vpop.f32.mrf.mxu0
    %v639 = vpop.f32.mrf.mxu0
    %v640 = vpop.f32.mrf.mxu0
    %641 = vdwg.mxu0
    %642 = vmatprep.subr.bf16.mxu0 0
    %643 = vmatpush1.bf16.msra.mxu0 %v497
    %644 = vmatprep.subr.bf16.mxu0 0
    %645 = vmatpush1.bf16.msra.mxu0 %v496
    %646 = vmatprep.subr.bf16.mxu0 0
    %647 = vmatpush1.bf16.msra.mxu0 %v495
    %648 = vmatprep.subr.bf16.mxu0 0
    %649 = vmatpush1.bf16.msra.mxu0 %v494
    %650 = vmatprep.subr.bf16.mxu0 0
    %651 = vmatpush1.bf16.msra.mxu0 %v493
    %652 = vmatprep.subr.bf16.mxu0 0
    %653 = vmatpush1.bf16.msra.mxu0 %v492
    %654 = vmatprep.subr.bf16.mxu0 0
    %655 = vmatpush1.bf16.msra.mxu0 %v491
    %656 = vmatprep.subr.bf16.mxu0 0
    %657 = vmatpush1.bf16.msra.mxu0 %v490
    %658 = vmatprep.subr.bf16.mxu0 0
    %659 = vmatpush2.bf16.msra.mxu0 %v505
    %660 = vmatprep.subr.bf16.mxu0 0
    %661 = vmatpush2.bf16.msra.mxu0 %v504
    %662 = vmatprep.subr.bf16.mxu0 0
    %663 = vmatpush2.bf16.msra.mxu0 %v503
    %664 = vmatprep.subr.bf16.mxu0 0
    %665 = vmatpush2.bf16.msra.mxu0 %v502
    %666 = vmatprep.subr.bf16.mxu0 0
    %667 = vmatpush2.bf16.msra.mxu0 %v501
    %668 = vmatprep.subr.bf16.mxu0 0
    %669 = vmatpush2.bf16.msra.mxu0 %v500
    %670 = vmatprep.subr.bf16.mxu0 0
    %671 = vmatpush2.bf16.msra.mxu0 %v499
    %672 = vmatprep.subr.bf16.mxu0 0
    %673 = vmatpush2.bf16.msra.mxu0 %v498
    %674 = vmatprep.mubr.bf16.mxu0 %v85
    %675 = vmatmul.mubr.bf16.gmra.mxu0 %v84
    %v676 = vpop.f32.mrf.mxu0
    %v677 = vadd.f32 %v637, %v676
    %v678 = vpop.f32.mrf.mxu0
    %v679 = vpop.f32.mrf.mxu0
    %v680 = vpop.f32.mrf.mxu0
    %681 = vdwg.mxu0
    %682 = vmatprep.subr.bf16.mxu0 0
    %683 = vmatpush1.bf16.msra.mxu0 %v513
    %684 = vmatprep.subr.bf16.mxu0 0
    %685 = vmatpush1.bf16.msra.mxu0 %v512
    %686 = vmatprep.subr.bf16.mxu0 0
    %687 = vmatpush1.bf16.msra.mxu0 %v511
    %688 = vmatprep.subr.bf16.mxu0 0
    %689 = vmatpush1.bf16.msra.mxu0 %v510
    %690 = vmatprep.subr.bf16.mxu0 0
    %691 = vmatpush1.bf16.msra.mxu0 %v509
    %692 = vmatprep.subr.bf16.mxu0 0
    %693 = vmatpush1.bf16.msra.mxu0 %v508
    %694 = vmatprep.subr.bf16.mxu0 0
    %695 = vmatpush1.bf16.msra.mxu0 %v507
    %696 = vmatprep.subr.bf16.mxu0 0
    %697 = vmatpush1.bf16.msra.mxu0 %v506
    %698 = vmatprep.subr.bf16.mxu0 0
    %699 = vmatpush2.bf16.msra.mxu0 %v521
    %700 = vmatprep.subr.bf16.mxu0 0
    %701 = vmatpush2.bf16.msra.mxu0 %v520
    %702 = vmatprep.subr.bf16.mxu0 0
    %703 = vmatpush2.bf16.msra.mxu0 %v519
    %704 = vmatprep.subr.bf16.mxu0 0
    %705 = vmatpush2.bf16.msra.mxu0 %v518
    %706 = vmatprep.subr.bf16.mxu0 0
    %707 = vmatpush2.bf16.msra.mxu0 %v517
    %708 = vmatprep.subr.bf16.mxu0 0
    %709 = vmatpush2.bf16.msra.mxu0 %v516
    %710 = vmatprep.subr.bf16.mxu0 0
    %711 = vmatpush2.bf16.msra.mxu0 %v515
    %712 = vmatprep.subr.bf16.mxu0 0
    %713 = vmatpush2.bf16.msra.mxu0 %v514
    %714 = vmatprep.mubr.bf16.mxu0 %v87
    %715 = vmatmul.mubr.bf16.gmra.mxu0 %v86
    %v716 = vpop.f32.mrf.mxu0
    %v717 = vadd.f32 %v677, %v716
    %v718 = vpop.f32.mrf.mxu0
    %v719 = vpop.f32.mrf.mxu0
    %v720 = vpop.f32.mrf.mxu0
    %721 = vdwg.mxu0
    %722 = vmatprep.subr.bf16.mxu0 0
    %723 = vmatpush1.bf16.msra.mxu0 %v529
    %724 = vmatprep.subr.bf16.mxu0 0
    %725 = vmatpush1.bf16.msra.mxu0 %v528
    %726 = vmatprep.subr.bf16.mxu0 0
    %727 = vmatpush1.bf16.msra.mxu0 %v527
    %728 = vmatprep.subr.bf16.mxu0 0
    %729 = vmatpush1.bf16.msra.mxu0 %v526
    %730 = vmatprep.subr.bf16.mxu0 0
    %731 = vmatpush1.bf16.msra.mxu0 %v525
    %732 = vmatprep.subr.bf16.mxu0 0
    %733 = vmatpush1.bf16.msra.mxu0 %v524
    %734 = vmatprep.subr.bf16.mxu0 0
    %735 = vmatpush1.bf16.msra.mxu0 %v523
    %736 = vmatprep.subr.bf16.mxu0 0
    %737 = vmatpush1.bf16.msra.mxu0 %v522
    %738 = vmatprep.subr.bf16.mxu0 0
    %739 = vmatpush2.bf16.msra.mxu0 %v537
    %740 = vmatprep.subr.bf16.mxu0 0
    %741 = vmatpush2.bf16.msra.mxu0 %v536
    %742 = vmatprep.subr.bf16.mxu0 0
    %743 = vmatpush2.bf16.msra.mxu0 %v535
    %744 = vmatprep.subr.bf16.mxu0 0
    %745 = vmatpush2.bf16.msra.mxu0 %v534
    %746 = vmatprep.subr.bf16.mxu0 0
    %747 = vmatpush2.bf16.msra.mxu0 %v533
    %748 = vmatprep.subr.bf16.mxu0 0
    %749 = vmatpush2.bf16.msra.mxu0 %v532
    %750 = vmatprep.subr.bf16.mxu0 0
    %751 = vmatpush2.bf16.msra.mxu0 %v531
    %752 = vmatprep.subr.bf16.mxu0 0
    %753 = vmatpush2.bf16.msra.mxu0 %v530
    %754 = vmatprep.mubr.bf16.mxu0 %v89
    %755 = vmatmul.mubr.bf16.gmra.mxu0 %v88
    %v756 = vpop.f32.mrf.mxu0
    %v757 = vadd.f32 %v717, %v756
    %v758 = vpop.f32.mrf.mxu0
    %v759 = vpop.f32.mrf.mxu0
    %v760 = vpop.f32.mrf.mxu0
    %761 = vdwg.mxu0
    %v762 = vadd.f32 %v73, %v757
    %763 = vst [vmem:[#allocation2] sm:$0xff] %v762
    // Predicated region
    $region38: #{tpu_custom_call.1} parent=1 // pred_check
      %p764 = pneg %p61
    $region39: #{tpu_custom_call.1} parent=1 // pred_check_branch
      %766 = sbr.rel (%p764) target = $region41
    $region40: #{tpu_custom_call.1} parent=1 // pred_region
      %v767 = vld [vmem:[#allocation2] sm:$0xff]
      %v768 = vmax.f32 %v767, 0.0
      %v769 = vpack.c.bf16 %v768, %v768
      %v770 = vld [vmem:[#allocation8] sm:$0xf]
      %v771 = vld [vmem:[#allocation8 + $0x4] sm:$0xf]
      %v772 = vld [vmem:[#allocation8 + $0x8] sm:$0xf]
      %v773 = vld [vmem:[#allocation8 + $0xc] sm:$0xf]
      %v774 = vld [vmem:[#allocation8 + $0x10] sm:$0xf]
      %v775 = vld [vmem:[#allocation8 + $0x14] sm:$0xf]
      %v776 = vld [vmem:[#allocation8 + $0x18] sm:$0xf]
      %v777 = vld [vmem:[#allocation8 + $0x1c] sm:$0xf]
      %v778 = vld [vmem:[#allocation8 + $0x20] sm:$0xf]
      %v779 = vld [vmem:[#allocation8 + $0x24] sm:$0xf]
      %v780 = vld [vmem:[#allocation8 + $0x28] sm:$0xf]
      %v781 = vld [vmem:[#allocation8 + $0x2c] sm:$0xf]
      %v782 = vld [vmem:[#allocation8 + $0x30] sm:$0xf]
      %v783 = vld [vmem:[#allocation8 + $0x34] sm:$0xf]
      %v784 = vld [vmem:[#allocation8 + $0x38] sm:$0xf]
      %v785 = vld [vmem:[#allocation8 + $0x3c] sm:$0xf]
      %v786 = vld [vmem:[%s4] sm:$0x1]
      %v788 = vlaneseq
      %v789 = vshrl.u32 %v788, 7
      %v790 = vsub.s32 0, %v789
      %v791 = vrot.slane %v786, %v790
      %v809 = vunpack.c.l.b16 %v770
      %v810 = vunpack.c.l.b16 %v771
      %v811 = vunpack.c.l.b16 %v772
      %v812 = vunpack.c.l.b16 %v773
      %v813 = vunpack.c.l.b16 %v774
      %v814 = vunpack.c.l.b16 %v775
      %v815 = vunpack.c.l.b16 %v776
      %v816 = vunpack.c.l.b16 %v777
      %v817 = vunpack.c.l.b16 %v778
      %v818 = vunpack.c.l.b16 %v779
      %v819 = vunpack.c.l.b16 %v780
      %v820 = vunpack.c.l.b16 %v781
      %v821 = vunpack.c.l.b16 %v782
      %v822 = vunpack.c.l.b16 %v783
      %v823 = vunpack.c.l.b16 %v784
      %v824 = vunpack.c.l.b16 %v785
      %v825 = vpack.c.b16 %v810, %v809
      %v826 = vpack.c.b16 %v812, %v811
      %v827 = vpack.c.b16 %v814, %v813
      %v828 = vpack.c.b16 %v816, %v815
      %v829 = vpack.c.b16 %v818, %v817
      %v830 = vpack.c.b16 %v820, %v819
      %v831 = vpack.c.b16 %v822, %v821
      %v832 = vpack.c.b16 %v824, %v823
      %841 = vmatprep.subr.bf16.mxu0 0
      %842 = vmatpush1.bf16.msra.mxu0 %v832
      %843 = vmatprep.subr.bf16.mxu0 0
      %844 = vmatpush1.bf16.msra.mxu0 %v831
      %845 = vmatprep.subr.bf16.mxu0 0
      %846 = vmatpush1.bf16.msra.mxu0 %v830
      %847 = vmatprep.subr.bf16.mxu0 0
      %848 = vmatpush1.bf16.msra.mxu0 %v829
      %849 = vmatprep.subr.bf16.mxu0 0
      %850 = vmatpush1.bf16.msra.mxu0 %v828
      %851 = vmatprep.subr.bf16.mxu0 0
      %852 = vmatpush1.bf16.msra.mxu0 %v827
      %853 = vmatprep.subr.bf16.mxu0 0
      %854 = vmatpush1.bf16.msra.mxu0 %v826
      %855 = vmatprep.subr.bf16.mxu0 0
      %856 = vmatpush1.bf16.msra.mxu0 %v825
      %857 = vmatprep.subr.bf16.mxu0 0
      %858 = vmatpush2.bf16.msra.mxu0 0
      %859 = vmatprep.subr.bf16.mxu0 0
      %860 = vmatpush2.bf16.msra.mxu0 0
      %861 = vmatprep.subr.bf16.mxu0 0
      %862 = vmatpush2.bf16.msra.mxu0 0
      %863 = vmatprep.subr.bf16.mxu0 0
      %864 = vmatpush2.bf16.msra.mxu0 0
      %865 = vmatprep.subr.bf16.mxu0 0
      %866 = vmatpush2.bf16.msra.mxu0 0
      %867 = vmatprep.subr.bf16.mxu0 0
      %868 = vmatpush2.bf16.msra.mxu0 0
      %869 = vmatprep.subr.bf16.mxu0 0
      %870 = vmatpush2.bf16.msra.mxu0 0
      %871 = vmatprep.subr.bf16.mxu0 0
      %872 = vmatpush2.bf16.msra.mxu0 0
      %873 = vmatprep.mubr.bf16.mxu0 0
      %874 = vmatmul.mubr.bf16.gmra.mxu0 %v769
      %v875 = vpop.f32.mrf.mxu0
      %v876 = vadd.f32 %v791, %v875
      %v877 = vpop.f32.mrf.mxu0
      %v878 = vpop.f32.mrf.mxu0
      %v879 = vpop.f32.mrf.mxu0
      %880 = vdwg.mxu0
      %881 = vst [vmem:[#allocation9] sm:$0xff] %v876
    $region41: #{tpu_custom_call.1} parent=1 // pred_fallthru
      _
    // Predicated region
    $region42: #{tpu_custom_call.1} parent=1 // pred_check
      _
    $region43: #{tpu_custom_call.1} parent=1 // pred_check_branch
      %883 = sbr.rel (0) target = $region45
    $region44: #{tpu_custom_call.1} parent=1 // pred_region
      %s885 = ssub.s32 128, 128
      %886 = vsyncadd [#allocation5], %s885
      %s888 = sshll.u32 [#allocation9], 4
      %s889 = int_to_ptr.vmem [resolvable:$true] %s888
      %891 = dma.vmem_to_hbm [thread:$0]  %s889, 128, %s5, [#allocation5]
    $region45: #{tpu_custom_call.1} parent=1 // pred_fallthru
      _
    // Predicated region
    $region46: #{tpu_custom_call.1} parent=1 // pred_check
      _
    $region47: #{tpu_custom_call.1} parent=1 // pred_check_branch
      %893 = sbr.rel (0) target = $region49
    $region48: #{tpu_custom_call.1} parent=1 // pred_region
      %894 = dma.done [#allocation5], 128
    $region49: #{tpu_custom_call.1} parent=1 // pred_fallthru
      _
    %895 = vsyncpa [#allocation4], 1
    %896 = vsyncpa [#allocation7], 1
    %897 = vsyncpa [#allocation5], 1

</llo_original>
